<compile_context>
chip_gen: v5e
topology: v5e:2x2
jax: 0.10.0
libtpu: 0.0.40
codegen_flags: <defaults>
</compile_context>

<pallas_src>
import functools
import math

import jax
import jax.numpy as jnp
from jax.experimental import pallas as pl
from jax.experimental.pallas import tpu as pltpu

LANE = 128      # vreg lane width
SUBLANE = 8     # vreg sublane count (f32)


def _round_up(x, m):
    return (x + m - 1) // m * m


# ---------------------------------------------------------------------------
# Kernel: fused MLP on one batch tile. All weights are VMEM-resident (their
# block index is constant across the grid so they are DMA'd once).
# ---------------------------------------------------------------------------
def _fused_mlp_kernel(*refs, num_hidden, include_last):
    x_ref = refs[0]
    o_ref = refs[-1]
    wb = refs[1:-1]  # w0, b0, w1, b1, ..., [w_last]

    h = x_ref[...]
    for i in range(num_hidden):
        w = wb[2 * i][...]
        b = wb[2 * i + 1][...]          # (1, N) -> broadcast over rows
        h = jnp.dot(h, w, preferred_element_type=jnp.float32) + b
        h = jnp.maximum(h, 0.0)          # hidden_activation = ReLU
    if include_last:
        w_last = wb[2 * num_hidden][...]
        # TODO(synk): for compute-bound configs cast h/w_last to bf16 here
        # (keep preferred_element_type=f32) for ~2x MXU throughput on v6e/v7x.
        h = jnp.dot(h.astype(w_last.dtype), w_last,
                    preferred_element_type=jnp.float32)
    o_ref[...] = h.astype(o_ref.dtype)


# ---------------------------------------------------------------------------
# Parameter init (matches the PyTorch module __init__), stored pre-padded to
# 128-lane multiples so the forward pass does no per-call weight padding.
# PyTorch weight is [out, in]; we store its transpose [in, out] so the kernel
# computes a plain x @ W.  fanin_init on a [out, in] tensor uses
# bound = 1/sqrt(size[0]) = 1/sqrt(out), reproduced exactly below.
# ---------------------------------------------------------------------------
def init_mlp_params(key, input_size, hidden_sizes, output_size,
                    b_init_value=0.0, init_w=0.001, dtype=jnp.float32):
    params = {"hidden": [], "last_w": None,
              "sizes": (int(input_size), tuple(int(h) for h in hidden_sizes),
                        int(output_size))}
    in_size = input_size
    in_p = _round_up(input_size, LANE)
    for next_size in hidden_sizes:
        key, kw = jax.random.split(key)
        bound = 1.0 / math.sqrt(float(next_size))
        n_p = _round_up(next_size, LANE)
        w = jax.random.uniform(kw, (in_size, next_size), dtype,
                               minval=-bound, maxval=bound)
        w_pad = jnp.zeros((in_p, n_p), dtype).at[:in_size, :next_size].set(w)
        b_pad = jnp.zeros((1, n_p), dtype).at[:, :next_size].set(
            jnp.asarray(b_init_value, dtype))
        params["hidden"].append((w_pad, b_pad))
        in_size, in_p = next_size, n_p
    key, kw = jax.random.split(key)
    out_p = _round_up(output_size, LANE)
    w_last = jax.random.uniform(kw, (in_size, output_size), dtype,
                                minval=-init_w, maxval=init_w)
    params["last_w"] = (jnp.zeros((in_p, out_p), dtype)
                        .at[:in_size, :output_size].set(w_last))
    return params


# ---------------------------------------------------------------------------
# Forward pass: one fused pallas_call for the whole network.
# ---------------------------------------------------------------------------
def mlp_forward(params, x, take_hidden_output=False):
    input_size, hidden_sizes, output_size = params["sizes"]
    M, K = x.shape
    assert K == input_size
    dtype = x.dtype

    num_hidden = len(params["hidden"])
    K0_p = (params["hidden"][0][0].shape[0] if num_hidden
            else params["last_w"].shape[0])

    # Batch tiling: at least one sublane group, cap the tile so big batches
    # still pipeline / shard across cores and stay inside scoped VMEM.
    M_p8 = _round_up(M, SUBLANE)
    tile_m = min(M_p8, 256)
    M_p = _round_up(M, tile_m)

    x_p = jnp.zeros((M_p, K0_p), dtype).at[:M, :K].set(x)

    inputs = [x_p]
    in_specs = [pl.BlockSpec((tile_m, K0_p), lambda i: (i, 0))]
    flops = 0
    for (w, b) in params["hidden"]:
        inputs += [w, b]
        in_specs += [pl.BlockSpec(w.shape, lambda i: (0, 0)),
                     pl.BlockSpec(b.shape, lambda i: (0, 0))]
        flops += 2 * M_p * w.shape[0] * w.shape[1]

    include_last = not take_hidden_output
    if include_last:
        w_last = params["last_w"]
        inputs.append(w_last)
        in_specs.append(pl.BlockSpec(w_last.shape, lambda i: (0, 0)))
        flops += 2 * M_p * w_last.shape[0] * w_last.shape[1]
        out_p, logical_out = w_last.shape[1], output_size
    else:
        out_p, logical_out = params["hidden"][-1][0].shape[1], hidden_sizes[-1]

    itemsize = x_p.dtype.itemsize
    bytes_accessed = (sum(int(a.size) * a.dtype.itemsize for a in inputs)
                      + M_p * out_p * itemsize)

    kernel = functools.partial(_fused_mlp_kernel,
                               num_hidden=num_hidden,
                               include_last=include_last)
    out = pl.pallas_call(
        kernel,
        out_shape=jax.ShapeDtypeStruct((M_p, out_p), dtype),
        grid=(M_p // tile_m,),
        in_specs=in_specs,
        out_specs=pl.BlockSpec((tile_m, out_p), lambda i: (i, 0)),
        compiler_params=pltpu.CompilerParams(
            dimension_semantics=("parallel",),
            vmem_limit_bytes=32 * 1024 * 1024,
        ),
        cost_estimate=pl.CostEstimate(flops=flops, transcendentals=0,
                                      bytes_accessed=bytes_accessed),
    )(*inputs)

    return out[:M, :logical_out]


if __name__ == "__main__":
    key = jax.random.PRNGKey(0)

    # Small shapes consistent with the module: an MLP on [batch, input_size].
    batch = 8
    input_size = 32
    hidden_sizes = (64, 64)
    output_size = 4

    key, kx, kp = jax.random.split(key, 3)
    x = jax.random.normal(kx, (batch, input_size), dtype=jnp.float32)
    params = init_mlp_params(kp, input_size, hidden_sizes, output_size)

    out = jax.block_until_ready(mlp_forward(params, x))
    hid = jax.block_until_ready(mlp_forward(params, x, take_hidden_output=True))

    # Pure-JAX reference with the logical (unpadded) parameter slices.
    h_ref = x
    in_size = input_size
    for (w_pad, b_pad), n in zip(params["hidden"], hidden_sizes):
        w = w_pad[:in_size, :n]
        b = b_pad[:, :n]
        h_ref = jnp.maximum(h_ref @ w + b, 0.0)
        in_size = n
    out_ref = h_ref @ params["last_w"][:in_size, :output_size]

    assert out.shape == (batch, output_size)
    assert hid.shape == (batch, hidden_sizes[-1])
    assert jnp.allclose(out, out_ref, atol=1e-5, rtol=1e-5)
    assert jnp.allclose(hid, h_ref, atol=1e-5, rtol=1e-5)

    print("KERNEL_OK")
</pallas_src>

<mosaic_0001>
module attributes {stable_mosaic.version = 11 : i64} {
  func.func @_fused_mlp_kernel(%arg0: i32, %arg1: memref<8x128xf32, #tpu.memory_space<vmem>>, %arg2: memref<128x128xf32, #tpu.memory_space<vmem>>, %arg3: memref<1x128xf32, #tpu.memory_space<vmem>>, %arg4: memref<128x128xf32, #tpu.memory_space<vmem>>, %arg5: memref<1x128xf32, #tpu.memory_space<vmem>>, %arg6: memref<128x128xf32, #tpu.memory_space<vmem>>, %arg7: memref<8x128xf32, #tpu.memory_space<vmem>>) attributes {dimension_semantics = [#tpu.dimension_semantics<parallel>], iteration_bounds = array<i64: 1>, scalar_prefetch = 0 : i64, scratch_operands = 0 : i64, tpu.core_type = #tpu.core_type<tc>, window_params = [{transform_indices = @transform_0, window_bounds = array<i64: 8, 128>}, {pipeline_mode = #tpu.pipeline_mode<synchronous>, transform_indices = @transform_1, window_bounds = array<i64: 128, 128>}, {pipeline_mode = #tpu.pipeline_mode<synchronous>, transform_indices = @transform_2, window_bounds = array<i64: 1, 128>}, {pipeline_mode = #tpu.pipeline_mode<synchronous>, transform_indices = @transform_3, window_bounds = array<i64: 128, 128>}, {pipeline_mode = #tpu.pipeline_mode<synchronous>, transform_indices = @transform_4, window_bounds = array<i64: 1, 128>}, {pipeline_mode = #tpu.pipeline_mode<synchronous>, transform_indices = @transform_5, window_bounds = array<i64: 128, 128>}, {transform_indices = @transform_6, window_bounds = array<i64: 8, 128>}]} {
    %c0 = arith.constant 0 : index
    %c0_0 = arith.constant 0 : index
    %0 = vector.load %arg1[%c0, %c0_0] : memref<8x128xf32, #tpu.memory_space<vmem>>, vector<8x128xf32>
    %c0_1 = arith.constant 0 : index
    %c0_2 = arith.constant 0 : index
    %1 = vector.load %arg2[%c0_1, %c0_2] : memref<128x128xf32, #tpu.memory_space<vmem>>, vector<128x128xf32>
    %c0_3 = arith.constant 0 : index
    %c0_4 = arith.constant 0 : index
    %2 = vector.load %arg3[%c0_3, %c0_4] : memref<1x128xf32, #tpu.memory_space<vmem>>, vector<1x128xf32>
    %cst = arith.constant dense<0.000000e+00> : vector<8x128xf32>
    %3 = tpu.matmul %0, %1, %cst {dimension_numbers = #tpu.dot_dimension_numbers<[1], [0], [0], [1], [0, 0, 1, 1], [], []>} : vector<8x128xf32>, vector<128x128xf32>, vector<8x128xf32> -> vector<8x128xf32>
    %4 = vector.broadcast %2 : vector<1x128xf32> to vector<8x128xf32>
    %5 = arith.addf %3, %4 : vector<8x128xf32>
    %cst_5 = arith.constant 0.000000e+00 : f32
    %6 = vector.broadcast %cst_5 : f32 to vector<8x128xf32>
    %7 = arith.maximumf %5, %6 : vector<8x128xf32>
    %c0_6 = arith.constant 0 : index
    %c0_7 = arith.constant 0 : index
    %8 = vector.load %arg4[%c0_6, %c0_7] : memref<128x128xf32, #tpu.memory_space<vmem>>, vector<128x128xf32>
    %c0_8 = arith.constant 0 : index
    %c0_9 = arith.constant 0 : index
    %9 = vector.load %arg5[%c0_8, %c0_9] : memref<1x128xf32, #tpu.memory_space<vmem>>, vector<1x128xf32>
    %cst_10 = arith.constant dense<0.000000e+00> : vector<8x128xf32>
    %10 = tpu.matmul %7, %8, %cst_10 {dimension_numbers = #tpu.dot_dimension_numbers<[1], [0], [0], [1], [0, 0, 1, 1], [], []>} : vector<8x128xf32>, vector<128x128xf32>, vector<8x128xf32> -> vector<8x128xf32>
    %11 = vector.broadcast %9 : vector<1x128xf32> to vector<8x128xf32>
    %12 = arith.addf %10, %11 : vector<8x128xf32>
    %cst_11 = arith.constant 0.000000e+00 : f32
    %13 = vector.broadcast %cst_11 : f32 to vector<8x128xf32>
    %14 = arith.maximumf %12, %13 : vector<8x128xf32>
    %c0_12 = arith.constant 0 : index
    %c0_13 = arith.constant 0 : index
    %15 = vector.load %arg6[%c0_12, %c0_13] : memref<128x128xf32, #tpu.memory_space<vmem>>, vector<128x128xf32>
    %cst_14 = arith.constant dense<0.000000e+00> : vector<8x128xf32>
    %16 = tpu.matmul %14, %15, %cst_14 {dimension_numbers = #tpu.dot_dimension_numbers<[1], [0], [0], [1], [0, 0, 1, 1], [], []>} : vector<8x128xf32>, vector<128x128xf32>, vector<8x128xf32> -> vector<8x128xf32>
    %c0_15 = arith.constant 0 : index
    %c0_16 = arith.constant 0 : index
    %17 = vector.load %arg7[%c0_15, %c0_16] : memref<8x128xf32, #tpu.memory_space<vmem>>, vector<8x128xf32>
    tpu.vector_store %arg7[%c0_15, %c0_16], %16 {strides = array<i32>} : memref<8x128xf32, #tpu.memory_space<vmem>>, vector<8x128xf32>,
    return
  }
  func.func @transform_0(%arg0: i32) -> (i32, i32) {
    %c0_i32 = arith.constant 0 : i32
    %c0_i32_0 = arith.constant 0 : i32
    return %arg0, %c0_i32 : i32, i32
  }
  func.func @transform_1(%arg0: i32) -> (i32, i32) {
    %c0_i32 = arith.constant 0 : i32
    %c0_i32_0 = arith.constant 0 : i32
    %c0_i32_1 = arith.constant 0 : i32
    return %c0_i32, %c0_i32_0 : i32, i32
  }
  func.func @transform_2(%arg0: i32) -> (i32, i32) {
    %c0_i32 = arith.constant 0 : i32
    %c0_i32_0 = arith.constant 0 : i32
    %c0_i32_1 = arith.constant 0 : i32
    return %c0_i32, %c0_i32_0 : i32, i32
  }
  func.func @transform_3(%arg0: i32) -> (i32, i32) {
    %c0_i32 = arith.constant 0 : i32
    %c0_i32_0 = arith.constant 0 : i32
    %c0_i32_1 = arith.constant 0 : i32
    return %c0_i32, %c0_i32_0 : i32, i32
  }
  func.func @transform_4(%arg0: i32) -> (i32, i32) {
    %c0_i32 = arith.constant 0 : i32
    %c0_i32_0 = arith.constant 0 : i32
    %c0_i32_1 = arith.constant 0 : i32
    return %c0_i32, %c0_i32_0 : i32, i32
  }
  func.func @transform_5(%arg0: i32) -> (i32, i32) {
    %c0_i32 = arith.constant 0 : i32
    %c0_i32_0 = arith.constant 0 : i32
    %c0_i32_1 = arith.constant 0 : i32
    return %c0_i32, %c0_i32_0 : i32, i32
  }
  func.func @transform_6(%arg0: i32) -> (i32, i32) {
    %c0_i32 = arith.constant 0 : i32
    %c0_i32_0 = arith.constant 0 : i32
    return %arg0, %c0_i32 : i32, i32
  }
}

</mosaic_0001>

<llo_original>
// kernel: tpu_custom_call.1
$region0: #{tpu_custom_call.1}
  #allocation0 [shape = 'u32[]', space=smem, size = 0x4, offset = 0x4, fixed_abs, tag = 'smem constant byte address 0x4 - core index']
  #allocation1 [shape = 'u32[72,128]{1,0:T(1,128)}', space=vmem, size = 0x9000, scoped, tag = 'internal scratch']
  %s0 = inlined_call_operand.hbm [shape: f32[8,128], index: 0, kind: input, shape index: {}]
  %s1 = inlined_call_operand.hbm [shape: f32[128,128], index: 1, kind: input, shape index: {}]
  %s2 = inlined_call_operand.vmem [shape: f32[1,128], index: 2, kind: input, shape index: {}]
  %s3 = inlined_call_operand.hbm [shape: f32[128,128], index: 3, kind: input, shape index: {}]
  %s4 = inlined_call_operand.vmem [shape: f32[1,128], index: 4, kind: input, shape index: {}]
  %s5 = inlined_call_operand.hbm [shape: f32[128,128], index: 5, kind: input, shape index: {}]
  %s6 = inlined_call_operand.hbm [shape: f32[8,128], index: 6, kind: output, shape index: {}]
  %s7 = sld [smem:[#allocation0]]
  $region50: #{tpu_custom_call.1} parent=0
    _
  %s9 = ssub.s32 1, %s7
  %s10 = scalar_select 0, %s9, %s7
  $region1: #{tpu_custom_call.1} parent=0
    #allocation2 [shape = 'u8[4096]{0}', space=vmem, size = 0x1000, scoped, tag = 'input window, operand 0, single buffered']
    #allocation3 [shape = 's32[1]{0}', space=sflag, size = 0x4, scoped, tag = 'scoped memory for tpu_custom_call.1']
    #allocation4 [shape = 's32[1]{0}', space=sflag, size = 0x4, scoped, tag = 'scoped memory for tpu_custom_call.1']
    #allocation5 [shape = 'u8[65536]{0}', space=vmem, size = 0x10000, scoped, tag = 'input window, operand 1, single buffered']
    #allocation6 [shape = 's32[1]{0}', space=sflag, size = 0x4, scoped, tag = 'scoped memory for tpu_custom_call.1']
    #allocation7 [shape = 'u8[65536]{0}', space=vmem, size = 0x10000, scoped, tag = 'input window, operand 3, single buffered']
    #allocation8 [shape = 'u8[65536]{0}', space=vmem, size = 0x10000, scoped, tag = 'input window, operand 5, single buffered']
    #allocation9 [shape = 's32[1]{0}', space=sflag, size = 0x4, scoped, tag = 'scoped memory for tpu_custom_call.1']
    #allocation10 [shape = 'u8[4096]{0}', space=vmem, size = 0x1000, scoped, tag = 'output window, operand 0, single buffered']
    %11 = vsyncpa [#allocation3], 0
    %12 = vsyncpa [#allocation6], 0
    %13 = vsyncpa [#allocation9], 0
    %14 = vsyncpa [#allocation4], 0
    // Predicated region
    $region2: #{tpu_custom_call.1} parent=1 // pred_check
      _
    $region3: #{tpu_custom_call.1} parent=1 // pred_check_branch
      %16 = sbr.rel (0) target = $region5
    $region4: #{tpu_custom_call.1} parent=1 // pred_region
      %18 = vsyncadd [#allocation3], 0
      %s20 = sshll.u32 %s0, 4
      %s21 = int_to_ptr.hbm [resolvable:$true] %s20
      %s22 = sshll.u32 [#allocation2], 4
      %s23 = int_to_ptr.vmem [resolvable:$true] %s22
      %25 = dma.hbm_to_vmem [thread:$0]  %s21, 128, %s23, [#allocation3]
    $region5: #{tpu_custom_call.1} parent=1 // pred_fallthru
      _
    // Predicated region
    $region6: #{tpu_custom_call.1} parent=1 // pred_check
      _
    $region7: #{tpu_custom_call.1} parent=1 // pred_check_branch
      %27 = sbr.rel (0) target = $region9
    $region8: #{tpu_custom_call.1} parent=1 // pred_region
      %29 = vsyncadd [#allocation6], 0
      %s30 = sshll.u32 %s1, 4
      %s31 = int_to_ptr.hbm [resolvable:$true] %s30
      %s32 = sshll.u32 [#allocation5], 4
      %s33 = int_to_ptr.vmem [resolvable:$true] %s32
      %38 = dma.hbm_to_vmem [thread:$0]  %s31, 2048, %s33, [#allocation6], 128, 128, 8
    $region9: #{tpu_custom_call.1} parent=1 // pred_fallthru
      _
    // Predicated region
    $region10: #{tpu_custom_call.1} parent=1 // pred_check
      _
    $region11: #{tpu_custom_call.1} parent=1 // pred_check_branch
      %40 = sbr.rel (0) target = $region13
    $region12: #{tpu_custom_call.1} parent=1 // pred_region
      _
    $region13: #{tpu_custom_call.1} parent=1 // pred_fallthru
      _
    // Predicated region
    $region14: #{tpu_custom_call.1} parent=1 // pred_check
      _
    $region15: #{tpu_custom_call.1} parent=1 // pred_check_branch
      %42 = sbr.rel (0) target = $region17
    $region16: #{tpu_custom_call.1} parent=1 // pred_region
      %44 = vsyncadd [#allocation6], 0
      %s45 = sshll.u32 %s3, 4
      %s46 = int_to_ptr.hbm [resolvable:$true] %s45
      %s47 = sshll.u32 [#allocation7], 4
      %s48 = int_to_ptr.vmem [resolvable:$true] %s47
      %53 = dma.hbm_to_vmem [thread:$0]  %s46, 2048, %s48, [#allocation6], 128, 128, 8
    $region17: #{tpu_custom_call.1} parent=1 // pred_fallthru
      _
    // Predicated region
    $region18: #{tpu_custom_call.1} parent=1 // pred_check
      _
    $region19: #{tpu_custom_call.1} parent=1 // pred_check_branch
      %55 = sbr.rel (0) target = $region21
    $region20: #{tpu_custom_call.1} parent=1 // pred_region
      _
    $region21: #{tpu_custom_call.1} parent=1 // pred_fallthru
      _
    // Predicated region
    $region22: #{tpu_custom_call.1} parent=1 // pred_check
      _
    $region23: #{tpu_custom_call.1} parent=1 // pred_check_branch
      %57 = sbr.rel (0) target = $region25
    $region24: #{tpu_custom_call.1} parent=1 // pred_region
      %59 = vsyncadd [#allocation9], 0
      %s60 = sshll.u32 %s5, 4
      %s61 = int_to_ptr.hbm [resolvable:$true] %s60
      %s62 = sshll.u32 [#allocation8], 4
      %s63 = int_to_ptr.vmem [resolvable:$true] %s62
      %68 = dma.hbm_to_vmem [thread:$0]  %s61, 2048, %s63, [#allocation9], 128, 128, 8
    $region25: #{tpu_custom_call.1} parent=1 // pred_fallthru
      _
    // Predicated region
    $region26: #{tpu_custom_call.1} parent=1 // pred_check
      _
    $region27: #{tpu_custom_call.1} parent=1 // pred_check_branch
      %70 = sbr.rel (0) target = $region29
    $region28: #{tpu_custom_call.1} parent=1 // pred_region
      %72 = dma.done [#allocation3], 128
    $region29: #{tpu_custom_call.1} parent=1 // pred_fallthru
      _
    // Predicated region
    $region30: #{tpu_custom_call.1} parent=1 // pred_check
      _
    $region31: #{tpu_custom_call.1} parent=1 // pred_check_branch
      %74 = sbr.rel (0) target = $region33
    $region32: #{tpu_custom_call.1} parent=1 // pred_region
      %76 = dma.done [#allocation6], 2048
    $region33: #{tpu_custom_call.1} parent=1 // pred_fallthru
      _
    // Predicated region
    $region34: #{tpu_custom_call.1} parent=1 // pred_check
      _
    $region35: #{tpu_custom_call.1} parent=1 // pred_check_branch
      %78 = sbr.rel (0) target = $region37
    $region36: #{tpu_custom_call.1} parent=1 // pred_region
      %80 = dma.done [#allocation6], 2048
    $region37: #{tpu_custom_call.1} parent=1 // pred_fallthru
      _
    // Predicated region
    $region38: #{tpu_custom_call.1} parent=1 // pred_check
      _
    $region39: #{tpu_custom_call.1} parent=1 // pred_check_branch
      %82 = sbr.rel (0) target = $region41
    $region40: #{tpu_custom_call.1} parent=1 // pred_region
      %84 = dma.done [#allocation9], 2048
    $region41: #{tpu_custom_call.1} parent=1 // pred_fallthru
      _
    %v85 = vld [vmem:[#allocation2] sm:$0xff]
    %v86 = vld [vmem:[#allocation5] sm:$0xff]
    %v87 = vld [vmem:[#allocation5 + $0x8] sm:$0xff]
    %v88 = vld [vmem:[#allocation5 + $0x10] sm:$0xff]
    %v89 = vld [vmem:[#allocation5 + $0x18] sm:$0xff]
    %v90 = vld [vmem:[#allocation5 + $0x20] sm:$0xff]
    %v91 = vld [vmem:[#allocation5 + $0x28] sm:$0xff]
    %v92 = vld [vmem:[#allocation5 + $0x30] sm:$0xff]
    %v93 = vld [vmem:[#allocation5 + $0x38] sm:$0xff]
    %v94 = vld [vmem:[#allocation5 + $0x40] sm:$0xff]
    %v95 = vld [vmem:[#allocation5 + $0x48] sm:$0xff]
    %v96 = vld [vmem:[#allocation5 + $0x50] sm:$0xff]
    %v97 = vld [vmem:[#allocation5 + $0x58] sm:$0xff]
    %v98 = vld [vmem:[#allocation5 + $0x60] sm:$0xff]
    %v99 = vld [vmem:[#allocation5 + $0x68] sm:$0xff]
    %v100 = vld [vmem:[#allocation5 + $0x70] sm:$0xff]
    %v101 = vld [vmem:[#allocation5 + $0x78] sm:$0xff]
    %v102 = vld [vmem:[%s2] sm:$0x1]
    %v104 = vperm.slane %v102, 0
    %106 = vmatpush.msra.mxu0 %v101
    %107 = vmatpush.msra.mxu0 %v100
    %108 = vmatpush.msra.mxu0 %v99
    %109 = vmatpush.msra.mxu0 %v98
    %110 = vmatpush.msra.mxu0 %v97
    %111 = vmatpush.msra.mxu0 %v96
    %112 = vmatpush.msra.mxu0 %v95
    %113 = vmatpush.msra.mxu0 %v94
    %114 = vmatpush.msra.mxu0 %v93
    %115 = vmatpush.msra.mxu0 %v92
    %116 = vmatpush.msra.mxu0 %v91
    %117 = vmatpush.msra.mxu0 %v90
    %118 = vmatpush.msra.mxu0 %v89
    %119 = vmatpush.msra.mxu0 %v88
    %120 = vmatpush.msra.mxu0 %v87
    %121 = vmatpush.msra.mxu0 %v86
    %122 = vmatmul.f32.gmra.mxu0 %v85
    %v123 = vpop.f32.mrf.mxu0
    %v124 = vadd.f32 %v104, %v123
    %125 = vdwg.mxu0
    %v126 = vmax.f32 %v124, 0.0
    %v127 = vld [vmem:[#allocation7] sm:$0xff]
    %v128 = vld [vmem:[#allocation7 + $0x8] sm:$0xff]
    %v129 = vld [vmem:[#allocation7 + $0x10] sm:$0xff]
    %v130 = vld [vmem:[#allocation7 + $0x18] sm:$0xff]
    %v131 = vld [vmem:[#allocation7 + $0x20] sm:$0xff]
    %v132 = vld [vmem:[#allocation7 + $0x28] sm:$0xff]
    %v133 = vld [vmem:[#allocation7 + $0x30] sm:$0xff]
    %v134 = vld [vmem:[#allocation7 + $0x38] sm:$0xff]
    %v135 = vld [vmem:[#allocation7 + $0x40] sm:$0xff]
    %v136 = vld [vmem:[#allocation7 + $0x48] sm:$0xff]
    %v137 = vld [vmem:[#allocation7 + $0x50] sm:$0xff]
    %v138 = vld [vmem:[#allocation7 + $0x58] sm:$0xff]
    %v139 = vld [vmem:[#allocation7 + $0x60] sm:$0xff]
    %v140 = vld [vmem:[#allocation7 + $0x68] sm:$0xff]
    %v141 = vld [vmem:[#allocation7 + $0x70] sm:$0xff]
    %v142 = vld [vmem:[#allocation7 + $0x78] sm:$0xff]
    %v143 = vld [vmem:[%s4] sm:$0x1]
    %v145 = vperm.slane %v143, 0
    %147 = vmatpush.msra.mxu0 %v142
    %148 = vmatpush.msra.mxu0 %v141
    %149 = vmatpush.msra.mxu0 %v140
    %150 = vmatpush.msra.mxu0 %v139
    %151 = vmatpush.msra.mxu0 %v138
    %152 = vmatpush.msra.mxu0 %v137
    %153 = vmatpush.msra.mxu0 %v136
    %154 = vmatpush.msra.mxu0 %v135
    %155 = vmatpush.msra.mxu0 %v134
    %156 = vmatpush.msra.mxu0 %v133
    %157 = vmatpush.msra.mxu0 %v132
    %158 = vmatpush.msra.mxu0 %v131
    %159 = vmatpush.msra.mxu0 %v130
    %160 = vmatpush.msra.mxu0 %v129
    %161 = vmatpush.msra.mxu0 %v128
    %162 = vmatpush.msra.mxu0 %v127
    %163 = vmatmul.f32.gmra.mxu0 %v126
    %v164 = vpop.f32.mrf.mxu0
    %v165 = vadd.f32 %v145, %v164
    %166 = vdwg.mxu0
    %v167 = vmax.f32 %v165, 0.0
    %v168 = vld [vmem:[#allocation8] sm:$0xff]
    %v169 = vld [vmem:[#allocation8 + $0x8] sm:$0xff]
    %v170 = vld [vmem:[#allocation8 + $0x10] sm:$0xff]
    %v171 = vld [vmem:[#allocation8 + $0x18] sm:$0xff]
    %v172 = vld [vmem:[#allocation8 + $0x20] sm:$0xff]
    %v173 = vld [vmem:[#allocation8 + $0x28] sm:$0xff]
    %v174 = vld [vmem:[#allocation8 + $0x30] sm:$0xff]
    %v175 = vld [vmem:[#allocation8 + $0x38] sm:$0xff]
    %v176 = vld [vmem:[#allocation8 + $0x40] sm:$0xff]
    %v177 = vld [vmem:[#allocation8 + $0x48] sm:$0xff]
    %v178 = vld [vmem:[#allocation8 + $0x50] sm:$0xff]
    %v179 = vld [vmem:[#allocation8 + $0x58] sm:$0xff]
    %v180 = vld [vmem:[#allocation8 + $0x60] sm:$0xff]
    %v181 = vld [vmem:[#allocation8 + $0x68] sm:$0xff]
    %v182 = vld [vmem:[#allocation8 + $0x70] sm:$0xff]
    %v183 = vld [vmem:[#allocation8 + $0x78] sm:$0xff]
    %184 = vmatpush.msra.mxu0 %v183
    %185 = vmatpush.msra.mxu0 %v182
    %186 = vmatpush.msra.mxu0 %v181
    %187 = vmatpush.msra.mxu0 %v180
    %188 = vmatpush.msra.mxu0 %v179
    %189 = vmatpush.msra.mxu0 %v178
    %190 = vmatpush.msra.mxu0 %v177
    %191 = vmatpush.msra.mxu0 %v176
    %192 = vmatpush.msra.mxu0 %v175
    %193 = vmatpush.msra.mxu0 %v174
    %194 = vmatpush.msra.mxu0 %v173
    %195 = vmatpush.msra.mxu0 %v172
    %196 = vmatpush.msra.mxu0 %v171
    %197 = vmatpush.msra.mxu0 %v170
    %198 = vmatpush.msra.mxu0 %v169
    %199 = vmatpush.msra.mxu0 %v168
    %200 = vmatmul.f32.gmra.mxu0 %v167
    %v201 = vpop.f32.mrf.mxu0
    %v202 = vadd.f32 0.0, %v201
    %203 = vdwg.mxu0
    %204 = vst [vmem:[#allocation10] sm:$0xff] %v202
    // Predicated region
    $region42: #{tpu_custom_call.1} parent=1 // pred_check
      _
    $region43: #{tpu_custom_call.1} parent=1 // pred_check_branch
      %206 = sbr.rel (0) target = $region45
    $region44: #{tpu_custom_call.1} parent=1 // pred_region
      %208 = vsyncadd [#allocation4], 0
      %s210 = sshll.u32 [#allocation10], 4
      %s211 = int_to_ptr.vmem [resolvable:$true] %s210
      %s212 = sshll.u32 %s6, 4
      %s213 = int_to_ptr.hbm [resolvable:$true] %s212
      %215 = dma.vmem_to_hbm [thread:$0]  %s211, 128, %s213, [#allocation4]
    $region45: #{tpu_custom_call.1} parent=1 // pred_fallthru
      _
    // Predicated region
    $region46: #{tpu_custom_call.1} parent=1 // pred_check
      _
    $region47: #{tpu_custom_call.1} parent=1 // pred_check_branch
      %217 = sbr.rel (0) target = $region49
    $region48: #{tpu_custom_call.1} parent=1 // pred_region
      %219 = dma.done [#allocation4], 128
    $region49: #{tpu_custom_call.1} parent=1 // pred_fallthru
      _
    %220 = vsyncpa [#allocation3], 1
    %221 = vsyncpa [#allocation6], 1
    %222 = vsyncpa [#allocation9], 1
    %223 = vsyncpa [#allocation4], 1

</llo_original>
